<compile_context>
chip_gen: v7x
topology: tpu7x:2x2x1
jax: 0.10.0
libtpu: 0.0.40
codegen_flags: <defaults>
</compile_context>

<pallas_src>
import functools

import jax
import jax.numpy as jnp
from jax import lax
from jax.experimental import pallas as pl
from jax.experimental.pallas import tpu as pltpu

EPS = 1e-5


def _round_up(n, m):
    return ((n + m - 1) // m) * m


def _qnet_kernel(x_ref, w1_ref, w2_ref, w3_ref, vec_ref, out_ref, *, o_dim):
    """Fused 3-layer MLP with training-mode BatchNorm. Whole batch resident."""
    x = x_ref[...]

    # Coalesced per-feature slab, read once: rows = [g1, be1, g2, be2, b3, 0, 0, 0]
    vec = vec_ref[...]
    g1, be1 = vec[0:1, :], vec[1:2, :]
    g2, be2 = vec[2:3, :], vec[3:4, :]
    b3 = vec[4:5, :o_dim]

    def bn_relu(h, g, be):
        # One-pass batch stats (biased variance, matching PyTorch's normalization).
        # NOTE: E[h^2]-mu^2 can lose precision for |mean| >> std; fine at these scales.
        mu = jnp.mean(h, axis=0, keepdims=True)
        msq = jnp.mean(h * h, axis=0, keepdims=True)
        var = jnp.maximum(msq - mu * mu, 0.0)          # clamp guards cancellation
        scale = g * lax.rsqrt(var + EPS)               # (1, F) vector math ~ free
        shift = be - mu * scale                        # (1, F)
        return jnp.maximum(h * scale + shift, 0.0)     # 2 VPU ops / element

    # lin1 (bias exactly canceled by BN mean subtraction) -> bn1 -> relu
    h = bn_relu(jnp.dot(x, w1_ref[...], preferred_element_type=jnp.float32), g1, be1)
    # lin2 -> bn2 -> relu
    h = bn_relu(jnp.dot(h, w2_ref[...], preferred_element_type=jnp.float32), g2, be2)
    # lin3 output head (bias kept: no BN follows it); tiny masked store is fine.
    out_ref[...] = (jnp.dot(h, w3_ref[...], preferred_element_type=jnp.float32)
                    + b3).astype(out_ref.dtype)


def prepare_params(params):
    """One-time packing of parameters for the kernel (hoisted out of the forward).

    - w1: (in_f, h_p)  -- K dim left unpadded, N padded lane-dense to 128.
    - w2: (h_p, h_p)
    - w3: (h_p, out_f) -- output dim left unpadded (kernel emits (B, out_f)).
    - vec: (8, h_p) slab = [g1, be1, g2, be2, b3(padded), 0, 0, 0].
    Zero padding is exact: padded hidden lanes have gamma=beta=0 so they stay
    identically 0 through BN and ReLU, and padded weight rows contribute nothing.
    """
    in_f, hidden = params["w1"].shape
    out_f = params["w3"].shape[1]
    h_p = _round_up(hidden, 128)

    w1_p = jnp.pad(params["w1"].astype(jnp.float32), ((0, 0), (0, h_p - hidden)))
    w2_p = jnp.pad(params["w2"].astype(jnp.float32),
                   ((0, h_p - hidden), (0, h_p - hidden)))
    w3_p = jnp.pad(params["w3"].astype(jnp.float32), ((0, h_p - hidden), (0, 0)))

    def _row(v):
        v = jnp.asarray(v, jnp.float32).reshape(1, -1)
        return jnp.pad(v, ((0, 0), (0, h_p - v.shape[1])))

    vec = jnp.concatenate(
        [_row(params["g1"]), _row(params["be1"]),
         _row(params["g2"]), _row(params["be2"]),
         _row(params["b3"]),
         jnp.zeros((3, h_p), jnp.float32)],           # pad sublanes to 8
        axis=0)

    return dict(w1=w1_p, w2=w2_p, w3=w3_p, vec=vec)


@jax.jit
def qnetwork_forward(x, prepared):
    """Forward pass. `prepared` comes from prepare_params(); only the kernel runs here."""
    if x.ndim == 1:                       # PyTorch forward: unsqueeze 1-D input.
        # NOTE: training-mode BN with batch 1 gives var=0 (output collapses to
        # beta); PyTorch would raise for batch 1 in training mode.
        x = x[None, :]
    x = x.astype(jnp.float32)

    B, in_f = x.shape
    h_p = prepared["w1"].shape[1]
    out_f = prepared["w3"].shape[1]

    vmem = pl.BlockSpec(memory_space=pltpu.MemorySpace.VMEM)

    operand_bytes = 4 * (x.size + prepared["w1"].size + prepared["w2"].size
                         + prepared["w3"].size + prepared["vec"].size + B * out_f)
    cost = pl.CostEstimate(
        flops=2 * B * (in_f * h_p + h_p * h_p + h_p * out_f),
        transcendentals=0,
        bytes_accessed=operand_bytes)

    # Single resident block, no grid => no double buffering; only raise the
    # scoped-VMEM limit when actually needed, and leave >=25% headroom.
    est_bytes = operand_bytes + 4 * 2 * B * h_p       # + hidden intermediates
    compiler_params = None
    if est_bytes > (16 << 20):
        try:
            cap = pltpu.get_tpu_info().vmem_capacity_bytes
        except Exception:                              # pragma: no cover
            cap = 64 << 20                             # v7x per-TC physical VMEM
        compiler_params = pltpu.CompilerParams(
            vmem_limit_bytes=int(min(est_bytes + (4 << 20), (cap * 3) // 4)))

    return pl.pallas_call(
        functools.partial(_qnet_kernel, o_dim=out_f),
        out_shape=jax.ShapeDtypeStruct((B, out_f), jnp.float32),
        in_specs=[vmem] * 5,
        out_specs=vmem,
        compiler_params=compiler_params,
        cost_estimate=cost,
    )(x, prepared["w1"], prepared["w2"], prepared["w3"], prepared["vec"])


def init_params(key, input_size, output_size, hidden_size=100):
    """Deterministic init mirroring nn.Linear / nn.BatchNorm1d.

    Linear weights stored as (in, out) (transposed vs PyTorch's (out, in)).
    b1/b2 are kept for reference parity but never reach the kernel (they are
    exactly canceled by training-mode BatchNorm).
    """
    ks = jax.random.split(key, 6)

    def linear(kw, kb, fan_in, fan_out):
        bound = 1.0 / (fan_in ** 0.5)
        w = jax.random.uniform(kw, (fan_in, fan_out), jnp.float32, -bound, bound)
        b = jax.random.uniform(kb, (fan_out,), jnp.float32, -bound, bound)
        return w, b

    w1, b1 = linear(ks[0], ks[1], input_size, hidden_size)
    w2, b2 = linear(ks[2], ks[3], hidden_size, hidden_size)
    w3, b3 = linear(ks[4], ks[5], hidden_size, output_size)

    ones = jnp.ones((hidden_size,), jnp.float32)
    zeros = jnp.zeros((hidden_size,), jnp.float32)
    return dict(w1=w1, b1=b1, g1=ones, be1=zeros,
                w2=w2, b2=b2, g2=ones, be2=zeros,
                w3=w3, b3=b3)


def _reference(x, p):
    """Pure-JAX reference of the PyTorch forward (training-mode BN, with biases)."""
    if x.ndim == 1:
        x = x[None, :]

    def bn(h, g, be):
        mu = h.mean(0, keepdims=True)
        var = ((h - mu) ** 2).mean(0, keepdims=True)
        return (h - mu) / jnp.sqrt(var + EPS) * g + be

    h = jnp.maximum(bn(x @ p["w1"] + p["b1"], p["g1"], p["be1"]), 0.0)
    h = jnp.maximum(bn(h @ p["w2"] + p["b2"], p["g2"], p["be2"]), 0.0)
    return h @ p["w3"] + p["b3"]


if __name__ == "__main__":
    key = jax.random.PRNGKey(0)
    k_param, k_x = jax.random.split(key)

    batch = 8
    input_size = 16
    hidden_size = 100   # module default; padded to 128 once in prepare_params
    output_size = 8

    params = init_params(k_param, input_size, output_size, hidden_size)
    prepared = prepare_params(params)          # one-time packing, not per call
    x = jax.random.normal(k_x, (batch, input_size), jnp.float32)

    out = jax.block_until_ready(qnetwork_forward(x, prepared))
    ref = _reference(x, params)

    assert out.shape == (batch, output_size)
    assert jnp.allclose(out, ref, atol=1e-4, rtol=1e-4), \
        float(jnp.max(jnp.abs(out - ref)))

    print("KERNEL_OK")
</pallas_src>

<mosaic_0001>
module attributes {stable_mosaic.version = 11 : i64} {
  func.func @_qnet_kernel(%arg0: memref<8x16xf32, #tpu.memory_space<vmem>>, %arg1: memref<16x128xf32, #tpu.memory_space<vmem>>, %arg2: memref<128x128xf32, #tpu.memory_space<vmem>>, %arg3: memref<128x8xf32, #tpu.memory_space<vmem>>, %arg4: memref<8x128xf32, #tpu.memory_space<vmem>>, %arg5: memref<8x8xf32, #tpu.memory_space<vmem>>) attributes {dimension_semantics = [], scalar_prefetch = 0 : i64, scratch_operands = 0 : i64, tpu.core_type = #tpu.core_type<tc>} {
    %c0 = arith.constant 0 : index
    %c0_0 = arith.constant 0 : index
    %0 = vector.load %arg0[%c0, %c0_0] : memref<8x16xf32, #tpu.memory_space<vmem>>, vector<8x16xf32>
    %c0_1 = arith.constant 0 : index
    %c0_2 = arith.constant 0 : index
    %1 = vector.load %arg4[%c0_1, %c0_2] : memref<8x128xf32, #tpu.memory_space<vmem>>, vector<8x128xf32>
    %2 = vector.extract_strided_slice %1 {offsets = [0, 0], sizes = [1, 128], strides = [1, 1]} : vector<8x128xf32> to vector<1x128xf32>
    %3 = vector.extract_strided_slice %1 {offsets = [1, 0], sizes = [1, 128], strides = [1, 1]} : vector<8x128xf32> to vector<1x128xf32>
    %4 = vector.extract_strided_slice %1 {offsets = [2, 0], sizes = [1, 128], strides = [1, 1]} : vector<8x128xf32> to vector<1x128xf32>
    %5 = vector.extract_strided_slice %1 {offsets = [3, 0], sizes = [1, 128], strides = [1, 1]} : vector<8x128xf32> to vector<1x128xf32>
    %6 = vector.extract_strided_slice %1 {offsets = [4, 0], sizes = [1, 8], strides = [1, 1]} : vector<8x128xf32> to vector<1x8xf32>
    %c0_3 = arith.constant 0 : index
    %c0_4 = arith.constant 0 : index
    %7 = vector.load %arg1[%c0_3, %c0_4] : memref<16x128xf32, #tpu.memory_space<vmem>>, vector<16x128xf32>
    %cst = arith.constant dense<0.000000e+00> : vector<8x128xf32>
    %8 = tpu.matmul %0, %7, %cst {dimension_numbers = #tpu.dot_dimension_numbers<[1], [0], [0], [1], [0, 0, 1, 1], [], []>} : vector<8x16xf32>, vector<16x128xf32>, vector<8x128xf32> -> vector<8x128xf32>
    %cst_5 = arith.constant dense<0.000000e+00> : vector<128xf32>
    %9 = vector.multi_reduction <add>, %8, %cst_5 [0] : vector<8x128xf32> to vector<128xf32>
    %10 = vector.shape_cast %9 : vector<128xf32> to vector<1x128xf32>
    %cst_6 = arith.constant 8.000000e+00 : f32
    %11 = vector.broadcast %cst_6 : f32 to vector<1x128xf32>
    %12 = arith.divf %10, %11 : vector<1x128xf32>
    %13 = arith.mulf %8, %8 : vector<8x128xf32>
    %cst_7 = arith.constant dense<0.000000e+00> : vector<128xf32>
    %14 = vector.multi_reduction <add>, %13, %cst_7 [0] : vector<8x128xf32> to vector<128xf32>
    %15 = vector.shape_cast %14 : vector<128xf32> to vector<1x128xf32>
    %cst_8 = arith.constant 8.000000e+00 : f32
    %16 = vector.broadcast %cst_8 : f32 to vector<1x128xf32>
    %17 = arith.divf %15, %16 : vector<1x128xf32>
    %18 = arith.mulf %12, %12 : vector<1x128xf32>
    %19 = arith.subf %17, %18 : vector<1x128xf32>
    %cst_9 = arith.constant 0.000000e+00 : f32
    %20 = vector.broadcast %cst_9 : f32 to vector<1x128xf32>
    %21 = arith.maximumf %19, %20 : vector<1x128xf32>
    %cst_10 = arith.constant 9.99999974E-6 : f32
    %22 = vector.broadcast %cst_10 : f32 to vector<1x128xf32>
    %23 = arith.addf %21, %22 : vector<1x128xf32>
    %24 = math.rsqrt %23 : vector<1x128xf32>
    %25 = arith.mulf %2, %24 : vector<1x128xf32>
    %26 = arith.mulf %12, %25 : vector<1x128xf32>
    %27 = arith.subf %3, %26 : vector<1x128xf32>
    %28 = vector.broadcast %25 : vector<1x128xf32> to vector<8x128xf32>
    %29 = arith.mulf %8, %28 : vector<8x128xf32>
    %30 = vector.broadcast %27 : vector<1x128xf32> to vector<8x128xf32>
    %31 = arith.addf %29, %30 : vector<8x128xf32>
    %cst_11 = arith.constant 0.000000e+00 : f32
    %32 = vector.broadcast %cst_11 : f32 to vector<8x128xf32>
    %33 = arith.maximumf %31, %32 : vector<8x128xf32>
    %c0_12 = arith.constant 0 : index
    %c0_13 = arith.constant 0 : index
    %34 = vector.load %arg2[%c0_12, %c0_13] : memref<128x128xf32, #tpu.memory_space<vmem>>, vector<128x128xf32>
    %cst_14 = arith.constant dense<0.000000e+00> : vector<8x128xf32>
    %35 = tpu.matmul %33, %34, %cst_14 {dimension_numbers = #tpu.dot_dimension_numbers<[1], [0], [0], [1], [0, 0, 1, 1], [], []>} : vector<8x128xf32>, vector<128x128xf32>, vector<8x128xf32> -> vector<8x128xf32>
    %cst_15 = arith.constant dense<0.000000e+00> : vector<128xf32>
    %36 = vector.multi_reduction <add>, %35, %cst_15 [0] : vector<8x128xf32> to vector<128xf32>
    %37 = vector.shape_cast %36 : vector<128xf32> to vector<1x128xf32>
    %cst_16 = arith.constant 8.000000e+00 : f32
    %38 = vector.broadcast %cst_16 : f32 to vector<1x128xf32>
    %39 = arith.divf %37, %38 : vector<1x128xf32>
    %40 = arith.mulf %35, %35 : vector<8x128xf32>
    %cst_17 = arith.constant dense<0.000000e+00> : vector<128xf32>
    %41 = vector.multi_reduction <add>, %40, %cst_17 [0] : vector<8x128xf32> to vector<128xf32>
    %42 = vector.shape_cast %41 : vector<128xf32> to vector<1x128xf32>
    %cst_18 = arith.constant 8.000000e+00 : f32
    %43 = vector.broadcast %cst_18 : f32 to vector<1x128xf32>
    %44 = arith.divf %42, %43 : vector<1x128xf32>
    %45 = arith.mulf %39, %39 : vector<1x128xf32>
    %46 = arith.subf %44, %45 : vector<1x128xf32>
    %cst_19 = arith.constant 0.000000e+00 : f32
    %47 = vector.broadcast %cst_19 : f32 to vector<1x128xf32>
    %48 = arith.maximumf %46, %47 : vector<1x128xf32>
    %cst_20 = arith.constant 9.99999974E-6 : f32
    %49 = vector.broadcast %cst_20 : f32 to vector<1x128xf32>
    %50 = arith.addf %48, %49 : vector<1x128xf32>
    %51 = math.rsqrt %50 : vector<1x128xf32>
    %52 = arith.mulf %4, %51 : vector<1x128xf32>
    %53 = arith.mulf %39, %52 : vector<1x128xf32>
    %54 = arith.subf %5, %53 : vector<1x128xf32>
    %55 = vector.broadcast %52 : vector<1x128xf32> to vector<8x128xf32>
    %56 = arith.mulf %35, %55 : vector<8x128xf32>
    %57 = vector.broadcast %54 : vector<1x128xf32> to vector<8x128xf32>
    %58 = arith.addf %56, %57 : vector<8x128xf32>
    %cst_21 = arith.constant 0.000000e+00 : f32
    %59 = vector.broadcast %cst_21 : f32 to vector<8x128xf32>
    %60 = arith.maximumf %58, %59 : vector<8x128xf32>
    %c0_22 = arith.constant 0 : index
    %c0_23 = arith.constant 0 : index
    %61 = vector.load %arg3[%c0_22, %c0_23] : memref<128x8xf32, #tpu.memory_space<vmem>>, vector<128x8xf32>
    %cst_24 = arith.constant dense<0.000000e+00> : vector<8x8xf32>
    %62 = tpu.matmul %60, %61, %cst_24 {dimension_numbers = #tpu.dot_dimension_numbers<[1], [0], [0], [1], [0, 0, 1, 1], [], []>} : vector<8x128xf32>, vector<128x8xf32>, vector<8x8xf32> -> vector<8x8xf32>
    %63 = vector.broadcast %6 : vector<1x8xf32> to vector<8x8xf32>
    %64 = arith.addf %62, %63 : vector<8x8xf32>
    %c0_25 = arith.constant 0 : index
    %c0_26 = arith.constant 0 : index
    %65 = vector.load %arg5[%c0_25, %c0_26] : memref<8x8xf32, #tpu.memory_space<vmem>>, vector<8x8xf32>
    tpu.vector_store %arg5[%c0_25, %c0_26], %64 {strides = array<i32>} : memref<8x8xf32, #tpu.memory_space<vmem>>, vector<8x8xf32>,
    return
  }
}

</mosaic_0001>

<llo_original>
// kernel: qnetwork_forward.1
$region0: #{qnetwork_forward.1}
  #allocation0 [shape = 'u32[]', space=smem, size = 0x4, offset = 0x4, fixed_abs, tag = 'smem constant byte address 0x4 - core index']
  #allocation1 [shape = 'u32[144,128]{1,0:T(1,128)}', space=vmem, size = 0x12000, scoped, tag = 'internal scratch']
  %s0 = inlined_call_operand.hbm [shape: f32[8,16], index: 0, kind: input, shape index: {}]
  %s1 = inlined_call_operand.vmem [shape: f32[16,128], index: 1, kind: input, shape index: {}]
  %s2 = inlined_call_operand.vmem [shape: f32[128,128], index: 2, kind: input, shape index: {}]
  %s3 = inlined_call_operand.vmem [shape: f32[128,8], index: 3, kind: input, shape index: {}]
  %s4 = inlined_call_operand.hbm [shape: f32[8,128], index: 4, kind: input, shape index: {}]
  %s5 = inlined_call_operand.hbm [shape: f32[8,8], index: 5, kind: output, shape index: {}]
  %s6 = sld [smem:[#allocation0]]
  $region38: #{qnetwork_forward.1} parent=0
    _
  %s8 = ssub.s32 1, %s6
  %s9 = scalar_select 0, %s8, %s6
  $region1: #{qnetwork_forward.1} parent=0
    #allocation2 [shape = 'u8[4096]{0}', space=vmem, size = 0x1000, scoped, tag = 'input window, operand 0, single buffered']
    #allocation3 [shape = 's32[1]{0}', space=sflag, size = 0x4, scoped, tag = 'scoped memory for qnetwork_forward.1']
    #allocation4 [shape = 's32[1]{0}', space=sflag, size = 0x4, scoped, tag = 'scoped memory for qnetwork_forward.1']
    #allocation5 [shape = 'u8[4096]{0}', space=vmem, size = 0x1000, scoped, tag = 'input window, operand 4, single buffered']
    #allocation6 [shape = 's32[1]{0}', space=sflag, size = 0x4, scoped, tag = 'scoped memory for qnetwork_forward.1']
    #allocation7 [shape = 'u8[4096]{0}', space=vmem, size = 0x1000, scoped, tag = 'output window, operand 0, single buffered']
    %10 = vsyncpa [#allocation3], 0
    %11 = vsyncpa [#allocation6], 0
    %12 = vsyncpa [#allocation4], 0
    // Predicated region
    $region2: #{qnetwork_forward.1} parent=1 // pred_check
      _
    $region3: #{qnetwork_forward.1} parent=1 // pred_check_branch
      %14 = sbr.rel (0) target = $region5
    $region4: #{qnetwork_forward.1} parent=1 // pred_region
      %s16 = ssub.s32 128, 128
      %17 = vsyncadd [#allocation3], %s16
      %s19 = sshll.u32 [#allocation2], 4
      %s20 = int_to_ptr.vmem [resolvable:$true] %s19
      %22 = dma.hbm_to_vmem [thread:$0]  %s0, 128, %s20, [#allocation3]
    $region5: #{qnetwork_forward.1} parent=1 // pred_fallthru
      _
    // Predicated region
    $region6: #{qnetwork_forward.1} parent=1 // pred_check
      _
    $region7: #{qnetwork_forward.1} parent=1 // pred_check_branch
      %24 = sbr.rel (0) target = $region9
    $region8: #{qnetwork_forward.1} parent=1 // pred_region
      _
    $region9: #{qnetwork_forward.1} parent=1 // pred_fallthru
      _
    // Predicated region
    $region10: #{qnetwork_forward.1} parent=1 // pred_check
      _
    $region11: #{qnetwork_forward.1} parent=1 // pred_check_branch
      %26 = sbr.rel (0) target = $region13
    $region12: #{qnetwork_forward.1} parent=1 // pred_region
      _
    $region13: #{qnetwork_forward.1} parent=1 // pred_fallthru
      _
    // Predicated region
    $region14: #{qnetwork_forward.1} parent=1 // pred_check
      _
    $region15: #{qnetwork_forward.1} parent=1 // pred_check_branch
      %28 = sbr.rel (0) target = $region17
    $region16: #{qnetwork_forward.1} parent=1 // pred_region
      _
    $region17: #{qnetwork_forward.1} parent=1 // pred_fallthru
      _
    // Predicated region
    $region18: #{qnetwork_forward.1} parent=1 // pred_check
      _
    $region19: #{qnetwork_forward.1} parent=1 // pred_check_branch
      %30 = sbr.rel (0) target = $region21
    $region20: #{qnetwork_forward.1} parent=1 // pred_region
      %s32 = ssub.s32 128, 128
      %33 = vsyncadd [#allocation6], %s32
      %s35 = sshll.u32 [#allocation5], 4
      %s36 = int_to_ptr.vmem [resolvable:$true] %s35
      %38 = dma.hbm_to_vmem [thread:$0]  %s4, 128, %s36, [#allocation6]
    $region21: #{qnetwork_forward.1} parent=1 // pred_fallthru
      _
    // Predicated region
    $region22: #{qnetwork_forward.1} parent=1 // pred_check
      _
    $region23: #{qnetwork_forward.1} parent=1 // pred_check_branch
      %40 = sbr.rel (0) target = $region25
    $region24: #{qnetwork_forward.1} parent=1 // pred_region
      %41 = dma.done [#allocation3], 128
    $region25: #{qnetwork_forward.1} parent=1 // pred_fallthru
      _
    // Predicated region
    $region26: #{qnetwork_forward.1} parent=1 // pred_check
      _
    $region27: #{qnetwork_forward.1} parent=1 // pred_check_branch
      %43 = sbr.rel (0) target = $region29
    $region28: #{qnetwork_forward.1} parent=1 // pred_region
      %44 = dma.done [#allocation6], 128
    $region29: #{qnetwork_forward.1} parent=1 // pred_fallthru
      _
    %v45 = vld [vmem:[#allocation2] sm:$0xff]
    %v46 = vld [vmem:[#allocation5] sm:$0xff]
    %v47 = vld [vmem:[%s1] sm:$0xff]
    %v48 = vld [vmem:[%s1 + $0x8] sm:$0xff]
    %vm49 = vcmask 130048
    %v51 = vsel %vm49, %v45, 0
    %53 = vmatprep.subr.mxu0 0.0
    %54 = vmatpush1.msra.mxu0 %v47
    %55 = vmatprep.subr.mxu0 0.0
    %56 = vmatpush1.msra.mxu0 %v48
    %57 = vmatprep.subr.mxu0 0.0
    %58 = vmatpush1.msra.mxu0 0.0
    %59 = vmatprep.subr.mxu0 0.0
    %60 = vmatpush1.msra.mxu0 0.0
    %61 = vmatprep.subr.mxu0 0.0
    %62 = vmatpush1.msra.mxu0 0.0
    %63 = vmatprep.subr.mxu0 0.0
    %64 = vmatpush1.msra.mxu0 0.0
    %65 = vmatprep.subr.mxu0 0.0
    %66 = vmatpush1.msra.mxu0 0.0
    %67 = vmatprep.subr.mxu0 0.0
    %68 = vmatpush1.msra.mxu0 0.0
    %69 = vmatprep.subr.mxu0 0.0
    %70 = vmatpush1.msra.mxu0 0.0
    %71 = vmatprep.subr.mxu0 0.0
    %72 = vmatpush1.msra.mxu0 0.0
    %73 = vmatprep.subr.mxu0 0.0
    %74 = vmatpush1.msra.mxu0 0.0
    %75 = vmatprep.subr.mxu0 0.0
    %76 = vmatpush1.msra.mxu0 0.0
    %77 = vmatprep.subr.mxu0 0.0
    %78 = vmatpush1.msra.mxu0 0.0
    %79 = vmatprep.subr.mxu0 0.0
    %80 = vmatpush1.msra.mxu0 0.0
    %81 = vmatprep.subr.mxu0 0.0
    %82 = vmatpush1.msra.mxu0 0.0
    %83 = vmatprep.subr.mxu0 0.0
    %84 = vmatpush1.msra.mxu0 0.0
    %85 = vmatprep.subr.mxu0 0.0
    %86 = vmatpush1.msra.mxu0 0.0
    %87 = vmatprep.subr.mxu0 0.0
    %88 = vmatpush1.msra.mxu0 0.0
    %89 = vmatprep.subr.mxu0 0.0
    %90 = vmatpush1.msra.mxu0 0.0
    %91 = vmatprep.subr.mxu0 0.0
    %92 = vmatpush1.msra.mxu0 0.0
    %93 = vmatprep.subr.mxu0 0.0
    %94 = vmatpush1.msra.mxu0 0.0
    %95 = vmatprep.subr.mxu0 0.0
    %96 = vmatpush1.msra.mxu0 0.0
    %97 = vmatprep.subr.mxu0 0.0
    %98 = vmatpush1.msra.mxu0 0.0
    %99 = vmatprep.subr.mxu0 0.0
    %100 = vmatpush1.msra.mxu0 0.0
    %101 = vmatprep.subr.mxu0 0.0
    %102 = vmatpush1.msra.mxu0 0.0
    %103 = vmatprep.subr.mxu0 0.0
    %104 = vmatpush1.msra.mxu0 0.0
    %105 = vmatprep.subr.mxu0 0.0
    %106 = vmatpush1.msra.mxu0 0.0
    %107 = vmatprep.subr.mxu0 0.0
    %108 = vmatpush1.msra.mxu0 0.0
    %109 = vmatprep.subr.mxu0 0.0
    %110 = vmatpush1.msra.mxu0 0.0
    %111 = vmatprep.subr.mxu0 0.0
    %112 = vmatpush1.msra.mxu0 0.0
    %113 = vmatprep.subr.mxu0 0.0
    %114 = vmatpush1.msra.mxu0 0.0
    %115 = vmatprep.subr.mxu0 0.0
    %116 = vmatpush1.msra.mxu0 0.0
    %117 = vmatprep.mubr.f32.mxu0 0.0
    %118 = vmatmul.mubr.f32.gmra.mrb[0].mxu0 %v51
    %v119 = vpop.f32.mrb[0].mxu0
    %v120 = vadd.f32 0.0, %v119
    %v121 = vpop.f32.mrb[0].mxu0
    %122 = vdwg.mxu0
    %v123 = vrot.slane %v120, 4
    %v124 = vadd.f32 %v120, %v123
    %v125 = vrot.slane %v124, 2
    %v126 = vadd.f32 %v124, %v125
    %v127 = vrot.slane %v126, 1
    %v128 = vadd.f32 %v126, %v127
    %v129 = vrcp.pop 8.0
    %v130 = vmul.f32 %v128, %v129
    %v131 = vmul.f32 %v120, %v120
    %v132 = vrot.slane %v131, 4
    %v133 = vadd.f32 %v131, %v132
    %v134 = vrot.slane %v133, 2
    %v135 = vadd.f32 %v133, %v134
    %v136 = vrot.slane %v135, 1
    %v137 = vadd.f32 %v135, %v136
    %v138 = vmul.f32 %v137, %v129
    %v139 = vmul.f32 %v130, %v130
    %v140 = vsub.f32 %v138, %v139
    %v141 = vmax.f32 %v140, 0.0
    %v142 = vadd.f32 %v141, 1e-05
    %v143 = vrsqrt.pop %v142
    %v144 = vmul.f32 %v46, %v143
    %v145 = vmul.f32 %v130, %v144
    %v147 = vrot.slane %v145, 7
    %v149 = vsub.f32 %v46, %v147
    %v150 = vlaneseq
    %v151 = vshrl.u32 %v150, 7
    %v152 = vsub.s32 0, %v151
    %v153 = vrot.slane %v144, %v152
    %v154 = vmul.f32 %v120, %v153
    %v155 = vlaneseq
    %v156 = vshrl.u32 %v155, 7
    %v157 = vsub.s32 1, %v156
    %v158 = vrot.slane %v149, %v157
    %v159 = vadd.f32 %v154, %v158
    %v160 = vmax.f32 %v159, 0.0
    %v161 = vld [vmem:[%s2] sm:$0xff]
    %v162 = vld [vmem:[%s2 + $0x8] sm:$0xff]
    %v163 = vld [vmem:[%s2 + $0x10] sm:$0xff]
    %v164 = vld [vmem:[%s2 + $0x18] sm:$0xff]
    %v165 = vld [vmem:[%s2 + $0x20] sm:$0xff]
    %v166 = vld [vmem:[%s2 + $0x28] sm:$0xff]
    %v167 = vld [vmem:[%s2 + $0x30] sm:$0xff]
    %v168 = vld [vmem:[%s2 + $0x38] sm:$0xff]
    %v169 = vld [vmem:[%s2 + $0x40] sm:$0xff]
    %v170 = vld [vmem:[%s2 + $0x48] sm:$0xff]
    %v171 = vld [vmem:[%s2 + $0x50] sm:$0xff]
    %v172 = vld [vmem:[%s2 + $0x58] sm:$0xff]
    %v173 = vld [vmem:[%s2 + $0x60] sm:$0xff]
    %v174 = vld [vmem:[%s2 + $0x68] sm:$0xff]
    %v175 = vld [vmem:[%s2 + $0x70] sm:$0xff]
    %v176 = vld [vmem:[%s2 + $0x78] sm:$0xff]
    %177 = vmatprep.subr.mxu0 0.0
    %178 = vmatpush1.msra.mxu0 %v161
    %179 = vmatprep.subr.mxu0 0.0
    %180 = vmatpush1.msra.mxu0 %v162
    %181 = vmatprep.subr.mxu0 0.0
    %182 = vmatpush1.msra.mxu0 %v163
    %183 = vmatprep.subr.mxu0 0.0
    %184 = vmatpush1.msra.mxu0 %v164
    %185 = vmatprep.subr.mxu0 0.0
    %186 = vmatpush1.msra.mxu0 %v165
    %187 = vmatprep.subr.mxu0 0.0
    %188 = vmatpush1.msra.mxu0 %v166
    %189 = vmatprep.subr.mxu0 0.0
    %190 = vmatpush1.msra.mxu0 %v167
    %191 = vmatprep.subr.mxu0 0.0
    %192 = vmatpush1.msra.mxu0 %v168
    %193 = vmatprep.subr.mxu0 0.0
    %194 = vmatpush1.msra.mxu0 %v169
    %195 = vmatprep.subr.mxu0 0.0
    %196 = vmatpush1.msra.mxu0 %v170
    %197 = vmatprep.subr.mxu0 0.0
    %198 = vmatpush1.msra.mxu0 %v171
    %199 = vmatprep.subr.mxu0 0.0
    %200 = vmatpush1.msra.mxu0 %v172
    %201 = vmatprep.subr.mxu0 0.0
    %202 = vmatpush1.msra.mxu0 %v173
    %203 = vmatprep.subr.mxu0 0.0
    %204 = vmatpush1.msra.mxu0 %v174
    %205 = vmatprep.subr.mxu0 0.0
    %206 = vmatpush1.msra.mxu0 %v175
    %207 = vmatprep.subr.mxu0 0.0
    %208 = vmatpush1.msra.mxu0 %v176
    %209 = vmatprep.subr.mxu0 0.0
    %210 = vmatpush1.msra.mxu0 0.0
    %211 = vmatprep.subr.mxu0 0.0
    %212 = vmatpush1.msra.mxu0 0.0
    %213 = vmatprep.subr.mxu0 0.0
    %214 = vmatpush1.msra.mxu0 0.0
    %215 = vmatprep.subr.mxu0 0.0
    %216 = vmatpush1.msra.mxu0 0.0
    %217 = vmatprep.subr.mxu0 0.0
    %218 = vmatpush1.msra.mxu0 0.0
    %219 = vmatprep.subr.mxu0 0.0
    %220 = vmatpush1.msra.mxu0 0.0
    %221 = vmatprep.subr.mxu0 0.0
    %222 = vmatpush1.msra.mxu0 0.0
    %223 = vmatprep.subr.mxu0 0.0
    %224 = vmatpush1.msra.mxu0 0.0
    %225 = vmatprep.subr.mxu0 0.0
    %226 = vmatpush1.msra.mxu0 0.0
    %227 = vmatprep.subr.mxu0 0.0
    %228 = vmatpush1.msra.mxu0 0.0
    %229 = vmatprep.subr.mxu0 0.0
    %230 = vmatpush1.msra.mxu0 0.0
    %231 = vmatprep.subr.mxu0 0.0
    %232 = vmatpush1.msra.mxu0 0.0
    %233 = vmatprep.subr.mxu0 0.0
    %234 = vmatpush1.msra.mxu0 0.0
    %235 = vmatprep.subr.mxu0 0.0
    %236 = vmatpush1.msra.mxu0 0.0
    %237 = vmatprep.subr.mxu0 0.0
    %238 = vmatpush1.msra.mxu0 0.0
    %239 = vmatprep.subr.mxu0 0.0
    %240 = vmatpush1.msra.mxu0 0.0
    %241 = vmatprep.mubr.f32.mxu0 0.0
    %242 = vmatmul.mubr.f32.gmra.mrb[0].mxu0 %v160
    %v243 = vpop.f32.mrb[0].mxu0
    %v244 = vadd.f32 0.0, %v243
    %v245 = vpop.f32.mrb[0].mxu0
    %246 = vdwg.mxu0
    %v247 = vrot.slane %v244, 4
    %v248 = vadd.f32 %v244, %v247
    %v249 = vrot.slane %v248, 2
    %v250 = vadd.f32 %v248, %v249
    %v251 = vrot.slane %v250, 1
    %v252 = vadd.f32 %v250, %v251
    %v253 = vmul.f32 %v252, %v129
    %v254 = vmul.f32 %v244, %v244
    %v255 = vrot.slane %v254, 4
    %v256 = vadd.f32 %v254, %v255
    %v257 = vrot.slane %v256, 2
    %v258 = vadd.f32 %v256, %v257
    %v259 = vrot.slane %v258, 1
    %v260 = vadd.f32 %v258, %v259
    %v261 = vmul.f32 %v260, %v129
    %v262 = vmul.f32 %v253, %v253
    %v263 = vsub.f32 %v261, %v262
    %v264 = vmax.f32 %v263, 0.0
    %v265 = vadd.f32 %v264, 1e-05
    %v266 = vrsqrt.pop %v265
    %v267 = vmul.f32 %v46, %v266
    %v268 = vmul.f32 %v253, %v267
    %v270 = vrot.slane %v268, 7
    %v272 = vsub.f32 %v46, %v270
    %v273 = vlaneseq
    %v274 = vshrl.u32 %v273, 7
    %v275 = vsub.s32 2, %v274
    %v276 = vrot.slane %v267, %v275
    %v277 = vmul.f32 %v244, %v276
    %v278 = vlaneseq
    %v279 = vshrl.u32 %v278, 7
    %v280 = vsub.s32 3, %v279
    %v281 = vrot.slane %v272, %v280
    %v282 = vadd.f32 %v277, %v281
    %v283 = vmax.f32 %v282, 0.0
    %v284 = vld [vmem:[%s3] sm:$0xff]
    %v285 = vld [vmem:[%s3 + $0x8] sm:$0xff]
    %v286 = vld [vmem:[%s3 + $0x10] sm:$0xff]
    %v287 = vld [vmem:[%s3 + $0x18] sm:$0xff]
    %v288 = vld [vmem:[%s3 + $0x20] sm:$0xff]
    %v289 = vld [vmem:[%s3 + $0x28] sm:$0xff]
    %v290 = vld [vmem:[%s3 + $0x30] sm:$0xff]
    %v291 = vld [vmem:[%s3 + $0x38] sm:$0xff]
    %v292 = vld [vmem:[%s3 + $0x40] sm:$0xff]
    %v293 = vld [vmem:[%s3 + $0x48] sm:$0xff]
    %v294 = vld [vmem:[%s3 + $0x50] sm:$0xff]
    %v295 = vld [vmem:[%s3 + $0x58] sm:$0xff]
    %v296 = vld [vmem:[%s3 + $0x60] sm:$0xff]
    %v297 = vld [vmem:[%s3 + $0x68] sm:$0xff]
    %v298 = vld [vmem:[%s3 + $0x70] sm:$0xff]
    %v299 = vld [vmem:[%s3 + $0x78] sm:$0xff]
    %v300 = vlaneseq
    %v301 = vshrl.u32 %v300, 7
    %v302 = vsub.s32 4, %v301
    %v303 = vrot.slane %v46, %v302
    %304 = vmatprep.subr.mxu0 0.0
    %305 = vmatpush1.msra.mxu0 %v284
    %306 = vmatprep.subr.mxu0 0.0
    %307 = vmatpush1.msra.mxu0 %v285
    %308 = vmatprep.subr.mxu0 0.0
    %309 = vmatpush1.msra.mxu0 %v286
    %310 = vmatprep.subr.mxu0 0.0
    %311 = vmatpush1.msra.mxu0 %v287
    %312 = vmatprep.subr.mxu0 0.0
    %313 = vmatpush1.msra.mxu0 %v288
    %314 = vmatprep.subr.mxu0 0.0
    %315 = vmatpush1.msra.mxu0 %v289
    %316 = vmatprep.subr.mxu0 0.0
    %317 = vmatpush1.msra.mxu0 %v290
    %318 = vmatprep.subr.mxu0 0.0
    %319 = vmatpush1.msra.mxu0 %v291
    %320 = vmatprep.subr.mxu0 0.0
    %321 = vmatpush1.msra.mxu0 %v292
    %322 = vmatprep.subr.mxu0 0.0
    %323 = vmatpush1.msra.mxu0 %v293
    %324 = vmatprep.subr.mxu0 0.0
    %325 = vmatpush1.msra.mxu0 %v294
    %326 = vmatprep.subr.mxu0 0.0
    %327 = vmatpush1.msra.mxu0 %v295
    %328 = vmatprep.subr.mxu0 0.0
    %329 = vmatpush1.msra.mxu0 %v296
    %330 = vmatprep.subr.mxu0 0.0
    %331 = vmatpush1.msra.mxu0 %v297
    %332 = vmatprep.subr.mxu0 0.0
    %333 = vmatpush1.msra.mxu0 %v298
    %334 = vmatprep.subr.mxu0 0.0
    %335 = vmatpush1.msra.mxu0 %v299
    %336 = vmatprep.subr.mxu0 0.0
    %337 = vmatpush1.msra.mxu0 0.0
    %338 = vmatprep.subr.mxu0 0.0
    %339 = vmatpush1.msra.mxu0 0.0
    %340 = vmatprep.subr.mxu0 0.0
    %341 = vmatpush1.msra.mxu0 0.0
    %342 = vmatprep.subr.mxu0 0.0
    %343 = vmatpush1.msra.mxu0 0.0
    %344 = vmatprep.subr.mxu0 0.0
    %345 = vmatpush1.msra.mxu0 0.0
    %346 = vmatprep.subr.mxu0 0.0
    %347 = vmatpush1.msra.mxu0 0.0
    %348 = vmatprep.subr.mxu0 0.0
    %349 = vmatpush1.msra.mxu0 0.0
    %350 = vmatprep.subr.mxu0 0.0
    %351 = vmatpush1.msra.mxu0 0.0
    %352 = vmatprep.subr.mxu0 0.0
    %353 = vmatpush1.msra.mxu0 0.0
    %354 = vmatprep.subr.mxu0 0.0
    %355 = vmatpush1.msra.mxu0 0.0
    %356 = vmatprep.subr.mxu0 0.0
    %357 = vmatpush1.msra.mxu0 0.0
    %358 = vmatprep.subr.mxu0 0.0
    %359 = vmatpush1.msra.mxu0 0.0
    %360 = vmatprep.subr.mxu0 0.0
    %361 = vmatpush1.msra.mxu0 0.0
    %362 = vmatprep.subr.mxu0 0.0
    %363 = vmatpush1.msra.mxu0 0.0
    %364 = vmatprep.subr.mxu0 0.0
    %365 = vmatpush1.msra.mxu0 0.0
    %366 = vmatprep.subr.mxu0 0.0
    %367 = vmatpush1.msra.mxu0 0.0
    %368 = vmatprep.mubr.f32.mxu0 0.0
    %369 = vmatmul.mubr.f32.gmra.mrb[0].mxu0 %v283
    %v370 = vpop.f32.mrb[0].mxu0
    %v371 = vadd.f32 %v303, %v370
    %v372 = vpop.f32.mrb[0].mxu0
    %373 = vdwg.mxu0
    %vm374 = vcmask 64512
    %375 = vst.msk [vmem:[#allocation7] sm:$0xff] %vm374, %v371
    // Predicated region
    $region30: #{qnetwork_forward.1} parent=1 // pred_check
      _
    $region31: #{qnetwork_forward.1} parent=1 // pred_check_branch
      %377 = sbr.rel (0) target = $region33
    $region32: #{qnetwork_forward.1} parent=1 // pred_region
      %s379 = ssub.s32 128, 128
      %380 = vsyncadd [#allocation4], %s379
      %s382 = sshll.u32 [#allocation7], 4
      %s383 = int_to_ptr.vmem [resolvable:$true] %s382
      %385 = dma.vmem_to_hbm [thread:$0]  %s383, 128, %s5, [#allocation4]
    $region33: #{qnetwork_forward.1} parent=1 // pred_fallthru
      _
    // Predicated region
    $region34: #{qnetwork_forward.1} parent=1 // pred_check
      _
    $region35: #{qnetwork_forward.1} parent=1 // pred_check_branch
      %387 = sbr.rel (0) target = $region37
    $region36: #{qnetwork_forward.1} parent=1 // pred_region
      %388 = dma.done [#allocation4], 128
    $region37: #{qnetwork_forward.1} parent=1 // pred_fallthru
      _
    %389 = vsyncpa [#allocation3], 1
    %390 = vsyncpa [#allocation6], 1
    %391 = vsyncpa [#allocation4], 1

</llo_original>
